<compile_context>
chip_gen: v6e
topology: v6e:2x2x1
jax: 0.10.0
libtpu: 0.0.40
codegen_flags: <defaults>
</compile_context>

<pallas_src>
import functools

import jax
import jax.numpy as jnp
from jax.experimental import pallas as pl
from jax.experimental.pallas import tpu as pltpu


# --------------------------------------------------------------------------
# Kernel: pure 3-matmul chain on the MXU (Z gate + subtraction folded into W1
# host-side).  Operands are bf16; accumulation and ReLU are in f32; the f32
# ReLU output is cast back to bf16 before feeding the next dot.
# --------------------------------------------------------------------------
def _deepyknock_kernel(y_ref, w1_ref, w2_ref, w3_ref, o_ref):
    h = jnp.dot(y_ref[...], w1_ref[...], preferred_element_type=jnp.float32)
    h = jnp.maximum(h, 0.0).astype(w2_ref.dtype)          # ReLU in f32, cast
    h = jnp.dot(h, w2_ref[...], preferred_element_type=jnp.float32)
    h = jnp.maximum(h, 0.0).astype(w3_ref.dtype)
    out = jnp.dot(h, w3_ref[...], preferred_element_type=jnp.float32)
    o_ref[...] = out.astype(o_ref.dtype)


def _pad_cols(w, mult=128):
    pad = (-w.shape[1]) % mult
    return jnp.pad(w, ((0, 0), (0, pad))) if pad else w


def _pad_rows(w, rows):
    pad = rows - w.shape[0]
    return jnp.pad(w, ((0, pad), (0, 0))) if pad else w


# --------------------------------------------------------------------------
# One-time host-side weight preparation (hoisted out of the per-call path).
# --------------------------------------------------------------------------
def prepare_deepyknock_params(z_weight, w1, w2, w3, *, normalize=False,
                              compute_dtype=jnp.bfloat16):
    """z_weight: (2r,); w{1,2,3}: [in, out] (transpose of PyTorch weight).

    Returns (w1p, w2p, w3p) with the Z gate + front/back subtraction folded
    into w1, hidden/output dims zero-padded to multiples of 128 lanes, and
    everything cast to the MXU compute dtype."""
    r = w1.shape[0]

    # normalize_Z_weight() (module default: normalize=False -> identity).
    z = z_weight
    if normalize:
        denom = jnp.abs(z[:r]) + jnp.abs(z[r:])
        z = jnp.concatenate([jnp.abs(z[:r]) / denom, jnp.abs(z[r:]) / denom])

    # Fold gate + subtraction:  feats @ W1 == y @ W1f
    w1f = jnp.concatenate([z[:r, None] * w1, -z[r:, None] * w1], axis=0)

    w1p = _pad_cols(w1f)                              # (2r, H0p)
    w2p = _pad_cols(_pad_rows(w2, w1p.shape[1]))      # (H0p, H1p)
    w3p = _pad_cols(_pad_rows(w3, w2p.shape[1]))      # (H1p, Pp)  lane-dense

    return (w1p.astype(compute_dtype),
            w2p.astype(compute_dtype),
            w3p.astype(compute_dtype))


def _round_up(x, m):
    return -(-x // m) * m


# --------------------------------------------------------------------------
# Forward wrapper: batch-tiled Y stream, VMEM-resident weights, lane-dense
# padded output sliced back to p columns.
# --------------------------------------------------------------------------
def deepyknock_forward(y, params, *, p, block_rows=1024):
    """y: (B, 2r) f32; params = prepare_deepyknock_params(...); p = #X features."""
    w1p, w2p, w3p = params
    B, two_r = y.shape
    h0p = w1p.shape[1]
    h1p = w2p.shape[1]
    pp = w3p.shape[1]                 # padded output lanes (multiple of 128)

    # Batch tile: multiple of 8 rows, aim for >= 2 grid steps so the
    # "parallel" batch axis can be sharded across v7x's two TensorCores.
    tb = max(8, min(block_rows, _round_up(pl.cdiv(B, 2), 8)))
    tb = min(tb, _round_up(B, 8))
    grid = (pl.cdiv(B, tb),)

    y_c = y.astype(w1p.dtype)

    itemsize = jnp.dtype(w1p.dtype).itemsize
    flops = 2 * B * (two_r * h0p + h0p * h1p + h1p * pp)
    bytes_accessed = (y_c.size * itemsize
                      + (w1p.size + w2p.size + w3p.size) * itemsize
                      + B * pp * 4)
    cost = pl.CostEstimate(flops=flops, transcendentals=0,
                           bytes_accessed=bytes_accessed)

    out_padded = pl.pallas_call(
        _deepyknock_kernel,
        out_shape=jax.ShapeDtypeStruct((B, pp), jnp.float32),
        grid_spec=pl.GridSpec(
            grid=grid,
            in_specs=[
                pl.BlockSpec((tb, two_r), lambda i: (i, 0)),   # Y, streamed
                pl.BlockSpec(w1p.shape, lambda i: (0, 0)),     # weights stay
                pl.BlockSpec(w2p.shape, lambda i: (0, 0)),     # VMEM-resident
                pl.BlockSpec(w3p.shape, lambda i: (0, 0)),
            ],
            out_specs=pl.BlockSpec((tb, pp), lambda i: (i, 0)),  # lane-dense
        ),
        compiler_params=pltpu.CompilerParams(
            dimension_semantics=("parallel",)),
        cost_estimate=cost,
    )(y_c, w1p, w2p, w3p)

    return out_padded[:, :p]


def _reference_forward(y, z_weight, w1, w2, w3):
    f = z_weight[None, :] * y
    r = f.shape[1] // 2
    feats = f[:, :r] - f[:, r:]
    h = jnp.maximum(feats @ w1, 0.0)
    h = jnp.maximum(h @ w2, 0.0)
    return h @ w3


if __name__ == "__main__":
    # Small, deterministic problem consistent with the module:
    # r = Yfeatures.shape[1] // 2, hidden=[32, 32], p X-features.
    # B chosen so the batch grid has 2 steps (exercises tiling / megacore).
    B = 512      # batch of Y rows fed to forward()
    r = 16       # half the Y feature count
    p = 8        # number of X features (output dim of the MLP)
    h0, h1 = 32, 32

    key = jax.random.PRNGKey(0)
    k_y, k_w1, k_w2, k_w3 = jax.random.split(key, 4)

    y = jax.random.normal(k_y, (B, 2 * r), dtype=jnp.float32)

    # Parameters (deterministic init). Z_weight defaults to ones(2r).
    z_weight = jnp.ones((2 * r,), dtype=jnp.float32)
    # Linear weights stored as [in, out] (transpose of PyTorch's [out, in]),
    # uniform(-1/sqrt(fan_in), 1/sqrt(fan_in)) like nn.Linear default init.
    w1 = jax.random.uniform(k_w1, (r, h0), jnp.float32,
                            minval=-1.0 / r ** 0.5, maxval=1.0 / r ** 0.5)
    w2 = jax.random.uniform(k_w2, (h0, h1), jnp.float32,
                            minval=-1.0 / h0 ** 0.5, maxval=1.0 / h0 ** 0.5)
    w3 = jax.random.uniform(k_w3, (h1, p), jnp.float32,
                            minval=-1.0 / h1 ** 0.5, maxval=1.0 / h1 ** 0.5)

    # Host-side weight prep done once (hoisted out of the per-call path).
    params = prepare_deepyknock_params(z_weight, w1, w2, w3)
    params = jax.block_until_ready(params)

    out = deepyknock_forward(y, params, p=p)
    out = jax.block_until_ready(out)

    ref = _reference_forward(y, z_weight, w1, w2, w3)
    assert out.shape == (B, p)
    # bf16 operands (f32 accumulation) vs f32 reference -> loosened tolerance.
    assert jnp.allclose(out, ref, atol=3e-2, rtol=3e-2), "mismatch vs reference"

    # TODO(synk): dropout / sigmoid (binaryX) and the training loop are not
    # part of the default forward path and are not implemented in the kernel.
    print("KERNEL_OK")
</pallas_src>

<mosaic_0001>
module attributes {stable_mosaic.version = 11 : i64} {
  func.func @_deepyknock_kernel(%arg0: i32, %arg1: memref<256x32xbf16, #tpu.memory_space<vmem>>, %arg2: memref<32x128xbf16, #tpu.memory_space<vmem>>, %arg3: memref<128x128xbf16, #tpu.memory_space<vmem>>, %arg4: memref<128x128xbf16, #tpu.memory_space<vmem>>, %arg5: memref<256x128xf32, #tpu.memory_space<vmem>>) attributes {dimension_semantics = [#tpu.dimension_semantics<parallel>], iteration_bounds = array<i64: 2>, scalar_prefetch = 0 : i64, scratch_operands = 0 : i64, tpu.core_type = #tpu.core_type<tc>, window_params = [{transform_indices = @transform_0, window_bounds = array<i64: 256, 32>}, {pipeline_mode = #tpu.pipeline_mode<synchronous>, transform_indices = @transform_1, window_bounds = array<i64: 32, 128>}, {pipeline_mode = #tpu.pipeline_mode<synchronous>, transform_indices = @transform_2, window_bounds = array<i64: 128, 128>}, {pipeline_mode = #tpu.pipeline_mode<synchronous>, transform_indices = @transform_3, window_bounds = array<i64: 128, 128>}, {transform_indices = @transform_4, window_bounds = array<i64: 256, 128>}]} {
    %c0 = arith.constant 0 : index
    %c0_0 = arith.constant 0 : index
    %0 = vector.load %arg1[%c0, %c0_0] : memref<256x32xbf16, #tpu.memory_space<vmem>>, vector<256x32xbf16>
    %c0_1 = arith.constant 0 : index
    %c0_2 = arith.constant 0 : index
    %1 = vector.load %arg2[%c0_1, %c0_2] : memref<32x128xbf16, #tpu.memory_space<vmem>>, vector<32x128xbf16>
    %cst = arith.constant dense<0.000000e+00> : vector<256x128xf32>
    %2 = tpu.matmul %0, %1, %cst {dimension_numbers = #tpu.dot_dimension_numbers<[1], [0], [0], [1], [0, 0, 1, 1], [], []>} : vector<256x32xbf16>, vector<32x128xbf16>, vector<256x128xf32> -> vector<256x128xf32>
    %cst_3 = arith.constant 0.000000e+00 : f32
    %3 = vector.broadcast %cst_3 : f32 to vector<256x128xf32>
    %4 = arith.maximumf %2, %3 : vector<256x128xf32>
    %5 = arith.truncf %4 : vector<256x128xf32> to vector<256x128xbf16>
    %c0_4 = arith.constant 0 : index
    %c0_5 = arith.constant 0 : index
    %6 = vector.load %arg3[%c0_4, %c0_5] : memref<128x128xbf16, #tpu.memory_space<vmem>>, vector<128x128xbf16>
    %cst_6 = arith.constant dense<0.000000e+00> : vector<256x128xf32>
    %7 = tpu.matmul %5, %6, %cst_6 {dimension_numbers = #tpu.dot_dimension_numbers<[1], [0], [0], [1], [0, 0, 1, 1], [], []>} : vector<256x128xbf16>, vector<128x128xbf16>, vector<256x128xf32> -> vector<256x128xf32>
    %cst_7 = arith.constant 0.000000e+00 : f32
    %8 = vector.broadcast %cst_7 : f32 to vector<256x128xf32>
    %9 = arith.maximumf %7, %8 : vector<256x128xf32>
    %10 = arith.truncf %9 : vector<256x128xf32> to vector<256x128xbf16>
    %c0_8 = arith.constant 0 : index
    %c0_9 = arith.constant 0 : index
    %11 = vector.load %arg4[%c0_8, %c0_9] : memref<128x128xbf16, #tpu.memory_space<vmem>>, vector<128x128xbf16>
    %cst_10 = arith.constant dense<0.000000e+00> : vector<256x128xf32>
    %12 = tpu.matmul %10, %11, %cst_10 {dimension_numbers = #tpu.dot_dimension_numbers<[1], [0], [0], [1], [0, 0, 1, 1], [], []>} : vector<256x128xbf16>, vector<128x128xbf16>, vector<256x128xf32> -> vector<256x128xf32>
    %c0_11 = arith.constant 0 : index
    %c0_12 = arith.constant 0 : index
    %13 = vector.load %arg5[%c0_11, %c0_12] : memref<256x128xf32, #tpu.memory_space<vmem>>, vector<256x128xf32>
    tpu.vector_store %arg5[%c0_11, %c0_12], %12 {strides = array<i32>} : memref<256x128xf32, #tpu.memory_space<vmem>>, vector<256x128xf32>,
    return
  }
  func.func @transform_0(%arg0: i32) -> (i32, i32) {
    %c0_i32 = arith.constant 0 : i32
    %c0_i32_0 = arith.constant 0 : i32
    return %arg0, %c0_i32 : i32, i32
  }
  func.func @transform_1(%arg0: i32) -> (i32, i32) {
    %c0_i32 = arith.constant 0 : i32
    %c0_i32_0 = arith.constant 0 : i32
    %c0_i32_1 = arith.constant 0 : i32
    return %c0_i32, %c0_i32_0 : i32, i32
  }
  func.func @transform_2(%arg0: i32) -> (i32, i32) {
    %c0_i32 = arith.constant 0 : i32
    %c0_i32_0 = arith.constant 0 : i32
    %c0_i32_1 = arith.constant 0 : i32
    return %c0_i32, %c0_i32_0 : i32, i32
  }
  func.func @transform_3(%arg0: i32) -> (i32, i32) {
    %c0_i32 = arith.constant 0 : i32
    %c0_i32_0 = arith.constant 0 : i32
    %c0_i32_1 = arith.constant 0 : i32
    return %c0_i32, %c0_i32_0 : i32, i32
  }
  func.func @transform_4(%arg0: i32) -> (i32, i32) {
    %c0_i32 = arith.constant 0 : i32
    %c0_i32_0 = arith.constant 0 : i32
    return %arg0, %c0_i32 : i32, i32
  }
}

</mosaic_0001>

<llo_original>
// kernel: tpu_custom_call.1
$region0: #{tpu_custom_call.1}
  #allocation0 [shape = 'u32[]', space=smem, size = 0x4, offset = 0x4, fixed_abs, tag = 'smem constant byte address 0x4 - core index']
  #allocation1 [shape = 'u32[144,128]{1,0:T(1,128)}', space=vmem, size = 0x12000, scoped, tag = 'internal scratch']
  %s0 = inlined_call_operand.vmem [shape: bf16[512,32], index: 0, kind: input, shape index: {}]
  %s1 = inlined_call_operand.vmem [shape: bf16[32,128], index: 1, kind: input, shape index: {}]
  %s2 = inlined_call_operand.vmem [shape: bf16[128,128], index: 2, kind: input, shape index: {}]
  %s3 = inlined_call_operand.vmem [shape: bf16[128,128], index: 3, kind: input, shape index: {}]
  %s4 = inlined_call_operand.hbm [shape: f32[512,128], index: 4, kind: output, shape index: {}]
  %s5 = sld [smem:[#allocation0]]
  $region49: #{tpu_custom_call.1} parent=0
    _
  %s7 = ssub.s32 1, %s5
  %s8 = scalar_select 0, %s7, %s5
  $region1: #{tpu_custom_call.1} parent=0
    #allocation2 [shape = 'u8[262144]{0}', space=vmem, size = 0x40000, scoped, tag = 'output window, operand 0']
    #allocation3 [shape = 's32[2]{0}', space=sflag, size = 0x8, scoped, tag = 'scoped memory for tpu_custom_call.1']
    %9 = vsyncpa [#allocation3], 0
    %s10 = scalar_lea.sflag [#allocation3], 1
    %11 = vsyncpa %s10, 0
    loop: start=0, step=1, limit=4
    $region2: #{tpu_custom_call.1} parent=1 // loop_pre_header
      _
    $region3: #{tpu_custom_call.1} parent=1 // loop_header
      %s13 = sphi 0, %s17
      %p14 = scmp.ge.s32.totalorder %s13, 4
      %s23 = sphi 0, %s25
      %s26 = sphi 0, %s23
      %s27 = sphi 0, %s26
      %s43 = sphi 0, %s27
      %s47 = sphi 0, %s47
      %s49 = sphi 0, %s47
      %s50 = sphi 0, %s49
      %s64 = sphi 0, %s50
      %s68 = sphi 0, %s68
      %s70 = sphi 0, %s68
      %s71 = sphi 0, %s70
      %s85 = sphi 0, %s71
      %s89 = sphi 0, %s89
      %s91 = sphi 0, %s89
      %s92 = sphi 0, %s91
      %s106 = sphi 0, %s92
      %s112 = sphi 0, %s114
      %s115 = sphi 0, %s112
      %s116 = sphi 0, %s115
      %s132 = sphi 0, %s116
    $region4: #{tpu_custom_call.1} parent=1 // loop_header_branch
      %16 = sbr.rel (%p14) target = $region8
    $region5: #{tpu_custom_call.1} parent=1 // loop_body
      %s18 = ssub.s32 %s13, 1
      %s19 = ssub.s32 %s13, 2
      %s20 = sadd.s32 %s13, 1
      %s21 = ssub.s32 %s13, %s20
      %p22 = scmp.eq.s32.totalorder %s21, 0
      %s24 = sadd.s32 %s23, 1
      %s25 = scalar_select %p22, %s23, %s24
      %p28 = pneg %p22
      %p29 = scmp.eq.s32.totalorder %s13, 1
      %p30 = por %p28, %p29
      %p31 = scmp.ne.s32.totalorder %s23, %s26
      %p32 = scmp.eq.s32.totalorder %s13, 0
      %p33 = por %p31, %p32
      %p34 = scmp.ne.s32.totalorder %s23, %s26
      %p35 = scmp.eq.s32.totalorder %s18, 1
      %p36 = por %p34, %p35
      %p37 = scmp.ne.s32.totalorder %s26, %s27
      %p38 = scmp.eq.s32.totalorder %s18, 0
      %p39 = por %p37, %p38
      %p40 = scmp.ne.s32.totalorder %s26, %s27
      %p41 = scmp.eq.s32.totalorder %s19, 1
      %p42 = por %p40, %p41
      %p44 = scmp.ne.s32.totalorder %s27, %s43
      %p45 = scmp.eq.s32.totalorder %s19, 0
      %p46 = por %p44, %p45
      %s48 = sadd.s32 %s47, 1
      %p51 = scmp.eq.s32.totalorder %s13, 1
      %p52 = scmp.ne.s32.totalorder %s47, %s49
      %p53 = scmp.eq.s32.totalorder %s13, 0
      %p54 = por %p52, %p53
      %p55 = scmp.ne.s32.totalorder %s47, %s49
      %p56 = scmp.eq.s32.totalorder %s18, 1
      %p57 = por %p55, %p56
      %p58 = scmp.ne.s32.totalorder %s49, %s50
      %p59 = scmp.eq.s32.totalorder %s18, 0
      %p60 = por %p58, %p59
      %p61 = scmp.ne.s32.totalorder %s49, %s50
      %p62 = scmp.eq.s32.totalorder %s19, 1
      %p63 = por %p61, %p62
      %p65 = scmp.ne.s32.totalorder %s50, %s64
      %p66 = scmp.eq.s32.totalorder %s19, 0
      %p67 = por %p65, %p66
      %s69 = sadd.s32 %s68, 1
      %p72 = scmp.eq.s32.totalorder %s13, 1
      %p73 = scmp.ne.s32.totalorder %s68, %s70
      %p74 = scmp.eq.s32.totalorder %s13, 0
      %p75 = por %p73, %p74
      %p76 = scmp.ne.s32.totalorder %s68, %s70
      %p77 = scmp.eq.s32.totalorder %s18, 1
      %p78 = por %p76, %p77
      %p79 = scmp.ne.s32.totalorder %s70, %s71
      %p80 = scmp.eq.s32.totalorder %s18, 0
      %p81 = por %p79, %p80
      %p82 = scmp.ne.s32.totalorder %s70, %s71
      %p83 = scmp.eq.s32.totalorder %s19, 1
      %p84 = por %p82, %p83
      %p86 = scmp.ne.s32.totalorder %s71, %s85
      %p87 = scmp.eq.s32.totalorder %s19, 0
      %p88 = por %p86, %p87
      %s90 = sadd.s32 %s89, 1
      %p93 = scmp.eq.s32.totalorder %s13, 1
      %p94 = scmp.ne.s32.totalorder %s89, %s91
      %p95 = scmp.eq.s32.totalorder %s13, 0
      %p96 = por %p94, %p95
      %p97 = scmp.ne.s32.totalorder %s89, %s91
      %p98 = scmp.eq.s32.totalorder %s18, 1
      %p99 = por %p97, %p98
      %p100 = scmp.ne.s32.totalorder %s91, %s92
      %p101 = scmp.eq.s32.totalorder %s18, 0
      %p102 = por %p100, %p101
      %p103 = scmp.ne.s32.totalorder %s91, %s92
      %p104 = scmp.eq.s32.totalorder %s19, 1
      %p105 = por %p103, %p104
      %p107 = scmp.ne.s32.totalorder %s92, %s106
      %p108 = scmp.eq.s32.totalorder %s19, 0
      %p109 = por %p107, %p108
      %s110 = ssub.s32 %s13, %s20
      %p111 = scmp.eq.s32.totalorder %s110, 0
      %s113 = sadd.s32 %s112, 1
      %s114 = scalar_select %p111, %s112, %s113
      %p117 = pneg %p111
      %p118 = scmp.eq.s32.totalorder %s13, 1
      %p119 = por %p117, %p118
      %p120 = scmp.ne.s32.totalorder %s112, %s115
      %p121 = scmp.eq.s32.totalorder %s13, 0
      %p122 = por %p120, %p121
      %p123 = scmp.ne.s32.totalorder %s112, %s115
      %p124 = scmp.eq.s32.totalorder %s18, 1
      %p125 = por %p123, %p124
      %p126 = scmp.ne.s32.totalorder %s115, %s116
      %p127 = scmp.eq.s32.totalorder %s18, 0
      %p128 = por %p126, %p127
      %p129 = scmp.ne.s32.totalorder %s115, %s116
      %p130 = scmp.eq.s32.totalorder %s19, 1
      %p131 = por %p129, %p130
      %p133 = scmp.ne.s32.totalorder %s116, %s132
      %p134 = scmp.eq.s32.totalorder %s19, 0
      %p135 = por %p133, %p134
      %p136 = scmp.le.s32.totalorder 1, %s13
      %p137 = scmp.lt.s32.totalorder %s13, 3
      %p138 = pnand %p136, %p137
      %p139 = pneg %p138
      // Predicated region
      $region9: #{tpu_custom_call.1} parent=5 // pred_check
        _
      $region10: #{tpu_custom_call.1} parent=5 // pred_check_branch
        %141 = sbr.rel (%p138) target = $region12
      $region11: #{tpu_custom_call.1} parent=5 // pred_region
        %s142 = ssub.s32 %s13, 1
        // Predicated region
        $region13: #{tpu_custom_call.1} parent=11 // pred_check
          %p143 = pneg %p60
        $region14: #{tpu_custom_call.1} parent=11 // pred_check_branch
          %145 = sbr.rel (%p143) target = $region16
        $region15: #{tpu_custom_call.1} parent=11 // pred_region
          _
        $region16: #{tpu_custom_call.1} parent=11 // pred_fallthru
          _
        // Predicated region
        $region17: #{tpu_custom_call.1} parent=11 // pred_check
          %p146 = pneg %p81
        $region18: #{tpu_custom_call.1} parent=11 // pred_check_branch
          %148 = sbr.rel (%p146) target = $region20
        $region19: #{tpu_custom_call.1} parent=11 // pred_region
          _
        $region20: #{tpu_custom_call.1} parent=11 // pred_fallthru
          _
        // Predicated region
        $region21: #{tpu_custom_call.1} parent=11 // pred_check
          %p149 = pneg %p102
        $region22: #{tpu_custom_call.1} parent=11 // pred_check_branch
          %151 = sbr.rel (%p149) target = $region24
        $region23: #{tpu_custom_call.1} parent=11 // pred_region
          _
        $region24: #{tpu_custom_call.1} parent=11 // pred_fallthru
          _
      $region12: #{tpu_custom_call.1} parent=5 // pred_fallthru
        _
      %p152 = scmp.lt.s32.totalorder %s13, 2
      // Predicated region
      $region25: #{tpu_custom_call.1} parent=5 // pred_check
        %p153 = pneg %p152
      $region26: #{tpu_custom_call.1} parent=5 // pred_check_branch
        %155 = sbr.rel (%p153) target = $region28
      $region27: #{tpu_custom_call.1} parent=5 // pred_region
        // Predicated region
        $region29: #{tpu_custom_call.1} parent=27 // pred_check
          %p156 = pneg %p33
        $region30: #{tpu_custom_call.1} parent=27 // pred_check_branch
          %158 = sbr.rel (%p156) target = $region32
        $region31: #{tpu_custom_call.1} parent=27 // pred_region
          %s159 = smul.u32 32, %s13
          %p160 = scmp.lt.s32.totalorder %s159, 63
          %s161 = scalar_select %p160, %s159, 63
          %s162 = smul.addr %s161, 4
          %s163 = scalar_lea.vmem %s0, %s162
          %s164 = smul.u32 32, %s13
        $region32: #{tpu_custom_call.1} parent=27 // pred_fallthru
          _
      $region28: #{tpu_custom_call.1} parent=5 // pred_fallthru
        _
      %p165 = scmp.le.s32.totalorder 1, %s13
      %p166 = scmp.lt.s32.totalorder %s13, 3
      %p167 = pnand %p165, %p166
      %p168 = pneg %p167
      // Predicated region
      $region33: #{tpu_custom_call.1} parent=5 // pred_check
        _
      $region34: #{tpu_custom_call.1} parent=5 // pred_check_branch
        %170 = sbr.rel (%p167) target = $region36
      $region35: #{tpu_custom_call.1} parent=5 // pred_region
        %s171 = ssub.s32 %s13, 1
        %s172 = smul.u32 32, %s18
        %p173 = scmp.lt.s32.totalorder %s172, 63
        %s174 = scalar_select %p173, %s172, 63
        %s175 = smul.addr %s174, 4
        %s176 = scalar_lea.vmem %s0, %s175
        %p177 = pneg %p39
        %p178 = pneg %p36
        %p179 = pneg %p60
        %p180 = pneg %p57
        %p181 = pneg %p81
        %p182 = pneg %p78
        %p183 = pneg %p102
        %p184 = pneg %p99
        %p185 = pneg %p128
        %p186 = pneg %p125
        %s187 = sand.u32 %s115, 1
        %s188 = scalar_lea.sflag [#allocation3], %s187
        %s189 = sand.u32 %s115, 1
        %s190 = smul.addr %s189, 256
        %s191 = scalar_lea.vmem [#allocation2], %s190
        %s192 = smul.u32 32, %s18
        %p193 = scmp.lt.s32.totalorder %s192, 63
        %s194 = scalar_select %p193, %s192, 63
        %s195 = smul.addr %s194, 4
        %s196 = scalar_lea.vmem %s0, %s195
        %s197 = smul.u32 32, %s18
        %s198 = smul.u32 32, %s18
        %v200 = vld [vmem:[%s196] sm:$0xf]
        %v201 = vld [vmem:[%s196 + $0x4] sm:$0xf]
        %v202 = vld [vmem:[%s196 + $0x8] sm:$0xf]
        %v203 = vld [vmem:[%s196 + $0xc] sm:$0xf]
        %v204 = vld [vmem:[%s196 + $0x10] sm:$0xf]
        %v205 = vld [vmem:[%s196 + $0x14] sm:$0xf]
        %v206 = vld [vmem:[%s196 + $0x18] sm:$0xf]
        %v207 = vld [vmem:[%s196 + $0x1c] sm:$0xf]
        %v208 = vld [vmem:[%s196 + $0x20] sm:$0xf]
        %v209 = vld [vmem:[%s196 + $0x24] sm:$0xf]
        %v210 = vld [vmem:[%s196 + $0x28] sm:$0xf]
        %v211 = vld [vmem:[%s196 + $0x2c] sm:$0xf]
        %v212 = vld [vmem:[%s196 + $0x30] sm:$0xf]
        %v213 = vld [vmem:[%s196 + $0x34] sm:$0xf]
        %v214 = vld [vmem:[%s196 + $0x38] sm:$0xf]
        %v215 = vld [vmem:[%s196 + $0x3c] sm:$0xf]
        %v216 = vld [vmem:[%s196 + $0x40] sm:$0xf]
        %v217 = vld [vmem:[%s196 + $0x44] sm:$0xf]
        %v218 = vld [vmem:[%s196 + $0x48] sm:$0xf]
        %v219 = vld [vmem:[%s196 + $0x4c] sm:$0xf]
        %v220 = vld [vmem:[%s196 + $0x50] sm:$0xf]
        %v221 = vld [vmem:[%s196 + $0x54] sm:$0xf]
        %v222 = vld [vmem:[%s196 + $0x58] sm:$0xf]
        %v223 = vld [vmem:[%s196 + $0x5c] sm:$0xf]
        %v224 = vld [vmem:[%s196 + $0x60] sm:$0xf]
        %v225 = vld [vmem:[%s196 + $0x64] sm:$0xf]
        %v226 = vld [vmem:[%s196 + $0x68] sm:$0xf]
        %v227 = vld [vmem:[%s196 + $0x6c] sm:$0xf]
        %v228 = vld [vmem:[%s196 + $0x70] sm:$0xf]
        %v229 = vld [vmem:[%s196 + $0x74] sm:$0xf]
        %v230 = vld [vmem:[%s196 + $0x78] sm:$0xf]
        %v231 = vld [vmem:[%s196 + $0x7c] sm:$0xf]
        %v232 = vld [vmem:[%s1] sm:$0xf]
        %v233 = vld [vmem:[%s1 + $0x4] sm:$0xf]
        %v234 = vld [vmem:[%s1 + $0x8] sm:$0xf]
        %v235 = vld [vmem:[%s1 + $0xc] sm:$0xf]
        %v268 = vunpack.c.l.b16 %v200
        %v269 = vunpack.c.l.b16 %v201
        %v270 = vunpack.c.l.b16 %v202
        %v271 = vunpack.c.l.b16 %v203
        %v272 = vunpack.c.l.b16 %v204
        %v273 = vunpack.c.l.b16 %v205
        %v274 = vunpack.c.l.b16 %v206
        %v275 = vunpack.c.l.b16 %v207
        %v276 = vunpack.c.l.b16 %v208
        %v277 = vunpack.c.l.b16 %v209
        %v278 = vunpack.c.l.b16 %v210
        %v279 = vunpack.c.l.b16 %v211
        %v280 = vunpack.c.l.b16 %v212
        %v281 = vunpack.c.l.b16 %v213
        %v282 = vunpack.c.l.b16 %v214
        %v283 = vunpack.c.l.b16 %v215
        %v284 = vunpack.c.l.b16 %v216
        %v285 = vunpack.c.l.b16 %v217
        %v286 = vunpack.c.l.b16 %v218
        %v287 = vunpack.c.l.b16 %v219
        %v288 = vunpack.c.l.b16 %v220
        %v289 = vunpack.c.l.b16 %v221
        %v290 = vunpack.c.l.b16 %v222
        %v291 = vunpack.c.l.b16 %v223
        %v292 = vunpack.c.l.b16 %v224
        %v293 = vunpack.c.l.b16 %v225
        %v294 = vunpack.c.l.b16 %v226
        %v295 = vunpack.c.l.b16 %v227
        %v296 = vunpack.c.l.b16 %v228
        %v297 = vunpack.c.l.b16 %v229
        %v298 = vunpack.c.l.b16 %v230
        %v299 = vunpack.c.l.b16 %v231
        %v300 = vpack.c.b16 %v269, %v268
        %v301 = vpack.c.b16 %v271, %v270
        %v302 = vpack.c.b16 %v273, %v272
        %v303 = vpack.c.b16 %v275, %v274
        %v304 = vpack.c.b16 %v277, %v276
        %v305 = vpack.c.b16 %v279, %v278
        %v306 = vpack.c.b16 %v281, %v280
        %v307 = vpack.c.b16 %v283, %v282
        %v308 = vpack.c.b16 %v285, %v284
        %v309 = vpack.c.b16 %v287, %v286
        %v310 = vpack.c.b16 %v289, %v288
        %v311 = vpack.c.b16 %v291, %v290
        %v312 = vpack.c.b16 %v293, %v292
        %v313 = vpack.c.b16 %v295, %v294
        %v314 = vpack.c.b16 %v297, %v296
        %v315 = vpack.c.b16 %v299, %v298
        %v320 = vunpack.c.l.b16 %v232
        %v321 = vunpack.c.l.b16 %v233
        %v322 = vunpack.c.l.b16 %v234
        %v323 = vunpack.c.l.b16 %v235
        %v324 = vpack.c.b16 %v321, %v320
        %v325 = vpack.c.b16 %v323, %v322
        %vm328 = vcmask 261120
        %v330 = vsel %vm328, %v300, 0
        %v333 = vsel %vm328, %v301, 0
        %v336 = vsel %vm328, %v302, 0
        %v339 = vsel %vm328, %v303, 0
        %v342 = vsel %vm328, %v304, 0
        %v345 = vsel %vm328, %v305, 0
        %v348 = vsel %vm328, %v306, 0
        %v351 = vsel %vm328, %v307, 0
        %v354 = vsel %vm328, %v308, 0
        %v357 = vsel %vm328, %v309, 0
        %v360 = vsel %vm328, %v310, 0
        %v363 = vsel %vm328, %v311, 0
        %v366 = vsel %vm328, %v312, 0
        %v369 = vsel %vm328, %v313, 0
        %v372 = vsel %vm328, %v314, 0
        %v375 = vsel %vm328, %v315, 0
        %377 = vmatprep.subr.bf16.mxu0 0
        %378 = vmatpush1.bf16.msra.mxu0 0
        %379 = vmatprep.subr.bf16.mxu0 0
        %380 = vmatpush1.bf16.msra.mxu0 0
        %381 = vmatprep.subr.bf16.mxu0 0
        %382 = vmatpush1.bf16.msra.mxu0 0
        %383 = vmatprep.subr.bf16.mxu0 0
        %384 = vmatpush1.bf16.msra.mxu0 0
        %385 = vmatprep.subr.bf16.mxu0 0
        %386 = vmatpush1.bf16.msra.mxu0 0
        %387 = vmatprep.subr.bf16.mxu0 0
        %388 = vmatpush1.bf16.msra.mxu0 0
        %389 = vmatprep.subr.bf16.mxu0 0
        %390 = vmatpush1.bf16.msra.mxu0 %v325
        %391 = vmatprep.subr.bf16.mxu0 0
        %392 = vmatpush1.bf16.msra.mxu0 %v324
        %393 = vmatprep.subr.bf16.mxu0 0
        %394 = vmatpush2.bf16.msra.mxu0 0
        %395 = vmatprep.subr.bf16.mxu0 0
        %396 = vmatpush2.bf16.msra.mxu0 0
        %397 = vmatprep.subr.bf16.mxu0 0
        %398 = vmatpush2.bf16.msra.mxu0 0
        %399 = vmatprep.subr.bf16.mxu0 0
        %400 = vmatpush2.bf16.msra.mxu0 0
        %401 = vmatprep.subr.bf16.mxu0 0
        %402 = vmatpush2.bf16.msra.mxu0 0
        %403 = vmatprep.subr.bf16.mxu0 0
        %404 = vmatpush2.bf16.msra.mxu0 0
        %405 = vmatprep.subr.bf16.mxu0 0
        %406 = vmatpush2.bf16.msra.mxu0 0
        %407 = vmatprep.subr.bf16.mxu0 0
        %408 = vmatpush2.bf16.msra.mxu0 0
        %409 = vmatprep.mubr.bf16.mxu0 0
        %410 = vmatmul.mubr.bf16.gmra.mxu0 %v330
        %v411 = vpop.f32.mrf.mxu0
        %v412 = vadd.f32 0.0, %v411
        %v413 = vpop.f32.mrf.mxu0
        %v414 = vpop.f32.mrf.mxu0
        %v415 = vadd.f32 0.0, %v414
        %v416 = vpop.f32.mrf.mxu0
        %417 = vmatprep.mubr.bf16.mxu0 0
        %418 = vmatmul.mubr.bf16.gmra.mxu0 %v333
        %v419 = vpop.f32.mrf.mxu0
        %v420 = vadd.f32 0.0, %v419
        %v421 = vpop.f32.mrf.mxu0
        %v422 = vpop.f32.mrf.mxu0
        %v423 = vadd.f32 0.0, %v422
        %v424 = vpop.f32.mrf.mxu0
        %425 = vmatprep.mubr.bf16.mxu0 0
        %426 = vmatmul.mubr.bf16.gmra.mxu0 %v336
        %v427 = vpop.f32.mrf.mxu0
        %v428 = vadd.f32 0.0, %v427
        %v429 = vpop.f32.mrf.mxu0
        %v430 = vpop.f32.mrf.mxu0
        %v431 = vadd.f32 0.0, %v430
        %v432 = vpop.f32.mrf.mxu0
        %433 = vmatprep.mubr.bf16.mxu0 0
        %434 = vmatmul.mubr.bf16.gmra.mxu0 %v339
        %v435 = vpop.f32.mrf.mxu0
        %v436 = vadd.f32 0.0, %v435
        %v437 = vpop.f32.mrf.mxu0
        %v438 = vpop.f32.mrf.mxu0
        %v439 = vadd.f32 0.0, %v438
        %v440 = vpop.f32.mrf.mxu0
        %441 = vmatprep.mubr.bf16.mxu0 0
        %442 = vmatmul.mubr.bf16.gmra.mxu0 %v342
        %v443 = vpop.f32.mrf.mxu0
        %v444 = vadd.f32 0.0, %v443
        %v445 = vpop.f32.mrf.mxu0
        %v446 = vpop.f32.mrf.mxu0
        %v447 = vadd.f32 0.0, %v446
        %v448 = vpop.f32.mrf.mxu0
        %449 = vmatprep.mubr.bf16.mxu0 0
        %450 = vmatmul.mubr.bf16.gmra.mxu0 %v345
        %v451 = vpop.f32.mrf.mxu0
        %v452 = vadd.f32 0.0, %v451
        %v453 = vpop.f32.mrf.mxu0
        %v454 = vpop.f32.mrf.mxu0
        %v455 = vadd.f32 0.0, %v454
        %v456 = vpop.f32.mrf.mxu0
        %457 = vmatprep.mubr.bf16.mxu0 0
        %458 = vmatmul.mubr.bf16.gmra.mxu0 %v348
        %v459 = vpop.f32.mrf.mxu0
        %v460 = vadd.f32 0.0, %v459
        %v461 = vpop.f32.mrf.mxu0
        %v462 = vpop.f32.mrf.mxu0
        %v463 = vadd.f32 0.0, %v462
        %v464 = vpop.f32.mrf.mxu0
        %465 = vmatprep.mubr.bf16.mxu0 0
        %466 = vmatmul.mubr.bf16.gmra.mxu0 %v351
        %v467 = vpop.f32.mrf.mxu0
        %v468 = vadd.f32 0.0, %v467
        %v469 = vpop.f32.mrf.mxu0
        %v470 = vpop.f32.mrf.mxu0
        %v471 = vadd.f32 0.0, %v470
        %v472 = vpop.f32.mrf.mxu0
        %473 = vmatprep.mubr.bf16.mxu0 0
        %474 = vmatmul.mubr.bf16.gmra.mxu0 %v354
        %v475 = vpop.f32.mrf.mxu0
        %v476 = vadd.f32 0.0, %v475
        %v477 = vpop.f32.mrf.mxu0
        %v478 = vpop.f32.mrf.mxu0
        %v479 = vadd.f32 0.0, %v478
        %v480 = vpop.f32.mrf.mxu0
        %481 = vmatprep.mubr.bf16.mxu0 0
        %482 = vmatmul.mubr.bf16.gmra.mxu0 %v357
        %v483 = vpop.f32.mrf.mxu0
        %v484 = vadd.f32 0.0, %v483
        %v485 = vpop.f32.mrf.mxu0
        %v486 = vpop.f32.mrf.mxu0
        %v487 = vadd.f32 0.0, %v486
        %v488 = vpop.f32.mrf.mxu0
        %489 = vmatprep.mubr.bf16.mxu0 0
        %490 = vmatmul.mubr.bf16.gmra.mxu0 %v360
        %v491 = vpop.f32.mrf.mxu0
        %v492 = vadd.f32 0.0, %v491
        %v493 = vpop.f32.mrf.mxu0
        %v494 = vpop.f32.mrf.mxu0
        %v495 = vadd.f32 0.0, %v494
        %v496 = vpop.f32.mrf.mxu0
        %497 = vmatprep.mubr.bf16.mxu0 0
        %498 = vmatmul.mubr.bf16.gmra.mxu0 %v363
        %v499 = vpop.f32.mrf.mxu0
        %v500 = vadd.f32 0.0, %v499
        %v501 = vpop.f32.mrf.mxu0
        %v502 = vpop.f32.mrf.mxu0
        %v503 = vadd.f32 0.0, %v502
        %v504 = vpop.f32.mrf.mxu0
        %505 = vmatprep.mubr.bf16.mxu0 0
        %506 = vmatmul.mubr.bf16.gmra.mxu0 %v366
        %v507 = vpop.f32.mrf.mxu0
        %v508 = vadd.f32 0.0, %v507
        %v509 = vpop.f32.mrf.mxu0
        %v510 = vpop.f32.mrf.mxu0
        %v511 = vadd.f32 0.0, %v510
        %v512 = vpop.f32.mrf.mxu0
        %513 = vmatprep.mubr.bf16.mxu0 0
        %514 = vmatmul.mubr.bf16.gmra.mxu0 %v369
        %v515 = vpop.f32.mrf.mxu0
        %v516 = vadd.f32 0.0, %v515
        %v517 = vpop.f32.mrf.mxu0
        %v518 = vpop.f32.mrf.mxu0
        %v519 = vadd.f32 0.0, %v518
        %v520 = vpop.f32.mrf.mxu0
        %521 = vmatprep.mubr.bf16.mxu0 0
        %522 = vmatmul.mubr.bf16.gmra.mxu0 %v372
        %v523 = vpop.f32.mrf.mxu0
        %v524 = vadd.f32 0.0, %v523
        %v525 = vpop.f32.mrf.mxu0
        %v526 = vpop.f32.mrf.mxu0
        %v527 = vadd.f32 0.0, %v526
        %v528 = vpop.f32.mrf.mxu0
        %529 = vmatprep.mubr.bf16.mxu0 0
        %530 = vmatmul.mubr.bf16.gmra.mxu0 %v375
        %v531 = vpop.f32.mrf.mxu0
        %v532 = vadd.f32 0.0, %v531
        %v533 = vpop.f32.mrf.mxu0
        %v534 = vpop.f32.mrf.mxu0
        %v535 = vadd.f32 0.0, %v534
        %v536 = vpop.f32.mrf.mxu0
        %537 = vdwg.mxu0
        %v538 = vmax.f32 %v412, 0.0
        %v539 = vmax.f32 %v415, 0.0
        %v540 = vmax.f32 %v420, 0.0
        %v541 = vmax.f32 %v423, 0.0
        %v542 = vmax.f32 %v428, 0.0
        %v543 = vmax.f32 %v431, 0.0
        %v544 = vmax.f32 %v436, 0.0
        %v545 = vmax.f32 %v439, 0.0
        %v546 = vmax.f32 %v444, 0.0
        %v547 = vmax.f32 %v447, 0.0
        %v548 = vmax.f32 %v452, 0.0
        %v549 = vmax.f32 %v455, 0.0
        %v550 = vmax.f32 %v460, 0.0
        %v551 = vmax.f32 %v463, 0.0
        %v552 = vmax.f32 %v468, 0.0
        %v553 = vmax.f32 %v471, 0.0
        %v554 = vmax.f32 %v476, 0.0
        %v555 = vmax.f32 %v479, 0.0
        %v556 = vmax.f32 %v484, 0.0
        %v557 = vmax.f32 %v487, 0.0
        %v558 = vmax.f32 %v492, 0.0
        %v559 = vmax.f32 %v495, 0.0
        %v560 = vmax.f32 %v500, 0.0
        %v561 = vmax.f32 %v503, 0.0
        %v562 = vmax.f32 %v508, 0.0
        %v563 = vmax.f32 %v511, 0.0
        %v564 = vmax.f32 %v516, 0.0
        %v565 = vmax.f32 %v519, 0.0
        %v566 = vmax.f32 %v524, 0.0
        %v567 = vmax.f32 %v527, 0.0
        %v568 = vmax.f32 %v532, 0.0
        %v569 = vmax.f32 %v535, 0.0
        %v570 = vpack.c.bf16 %v539, %v538
        %v571 = vpack.c.bf16 %v541, %v540
        %v572 = vpack.c.bf16 %v543, %v542
        %v573 = vpack.c.bf16 %v545, %v544
        %v574 = vpack.c.bf16 %v547, %v546
        %v575 = vpack.c.bf16 %v549, %v548
        %v576 = vpack.c.bf16 %v551, %v550
        %v577 = vpack.c.bf16 %v553, %v552
        %v578 = vpack.c.bf16 %v555, %v554
        %v579 = vpack.c.bf16 %v557, %v556
        %v580 = vpack.c.bf16 %v559, %v558
        %v581 = vpack.c.bf16 %v561, %v560
        %v582 = vpack.c.bf16 %v563, %v562
        %v583 = vpack.c.bf16 %v565, %v564
        %v584 = vpack.c.bf16 %v567, %v566
        %v585 = vpack.c.bf16 %v569, %v568
        %v586 = vld [vmem:[%s2] sm:$0xf]
        %v587 = vld [vmem:[%s2 + $0x4] sm:$0xf]
        %v588 = vld [vmem:[%s2 + $0x8] sm:$0xf]
        %v589 = vld [vmem:[%s2 + $0xc] sm:$0xf]
        %v590 = vld [vmem:[%s2 + $0x10] sm:$0xf]
        %v591 = vld [vmem:[%s2 + $0x14] sm:$0xf]
        %v592 = vld [vmem:[%s2 + $0x18] sm:$0xf]
        %v593 = vld [vmem:[%s2 + $0x1c] sm:$0xf]
        %v594 = vld [vmem:[%s2 + $0x20] sm:$0xf]
        %v595 = vld [vmem:[%s2 + $0x24] sm:$0xf]
        %v596 = vld [vmem:[%s2 + $0x28] sm:$0xf]
        %v597 = vld [vmem:[%s2 + $0x2c] sm:$0xf]
        %v598 = vld [vmem:[%s2 + $0x30] sm:$0xf]
        %v599 = vld [vmem:[%s2 + $0x34] sm:$0xf]
        %v600 = vld [vmem:[%s2 + $0x38] sm:$0xf]
        %v601 = vld [vmem:[%s2 + $0x3c] sm:$0xf]
        %v618 = vunpack.c.l.b16 %v586
        %v619 = vunpack.c.l.b16 %v587
        %v620 = vunpack.c.l.b16 %v588
        %v621 = vunpack.c.l.b16 %v589
        %v622 = vunpack.c.l.b16 %v590
        %v623 = vunpack.c.l.b16 %v591
        %v624 = vunpack.c.l.b16 %v592
        %v625 = vunpack.c.l.b16 %v593
        %v626 = vunpack.c.l.b16 %v594
        %v627 = vunpack.c.l.b16 %v595
        %v628 = vunpack.c.l.b16 %v596
        %v629 = vunpack.c.l.b16 %v597
        %v630 = vunpack.c.l.b16 %v598
        %v631 = vunpack.c.l.b16 %v599
        %v632 = vunpack.c.l.b16 %v600
        %v633 = vunpack.c.l.b16 %v601
        %v634 = vpack.c.b16 %v619, %v618
        %v635 = vpack.c.b16 %v621, %v620
        %v636 = vpack.c.b16 %v623, %v622
        %v637 = vpack.c.b16 %v625, %v624
        %v638 = vpack.c.b16 %v627, %v626
        %v639 = vpack.c.b16 %v629, %v628
        %v640 = vpack.c.b16 %v631, %v630
        %v641 = vpack.c.b16 %v633, %v632
        %650 = vmatprep.subr.bf16.mxu0 0
        %651 = vmatpush1.bf16.msra.mxu0 %v641
        %652 = vmatprep.subr.bf16.mxu0 0
        %653 = vmatpush1.bf16.msra.mxu0 %v640
        %654 = vmatprep.subr.bf16.mxu0 0
        %655 = vmatpush1.bf16.msra.mxu0 %v639
        %656 = vmatprep.subr.bf16.mxu0 0
        %657 = vmatpush1.bf16.msra.mxu0 %v638
        %658 = vmatprep.subr.bf16.mxu0 0
        %659 = vmatpush1.bf16.msra.mxu0 %v637
        %660 = vmatprep.subr.bf16.mxu0 0
        %661 = vmatpush1.bf16.msra.mxu0 %v636
        %662 = vmatprep.subr.bf16.mxu0 0
        %663 = vmatpush1.bf16.msra.mxu0 %v635
        %664 = vmatprep.subr.bf16.mxu0 0
        %665 = vmatpush1.bf16.msra.mxu0 %v634
        %666 = vmatprep.subr.bf16.mxu0 0
        %667 = vmatpush2.bf16.msra.mxu0 0
        %668 = vmatprep.subr.bf16.mxu0 0
        %669 = vmatpush2.bf16.msra.mxu0 0
        %670 = vmatprep.subr.bf16.mxu0 0
        %671 = vmatpush2.bf16.msra.mxu0 0
        %672 = vmatprep.subr.bf16.mxu0 0
        %673 = vmatpush2.bf16.msra.mxu0 0
        %674 = vmatprep.subr.bf16.mxu0 0
        %675 = vmatpush2.bf16.msra.mxu0 0
        %676 = vmatprep.subr.bf16.mxu0 0
        %677 = vmatpush2.bf16.msra.mxu0 0
        %678 = vmatprep.subr.bf16.mxu0 0
        %679 = vmatpush2.bf16.msra.mxu0 0
        %680 = vmatprep.subr.bf16.mxu0 0
        %681 = vmatpush2.bf16.msra.mxu0 0
        %682 = vmatprep.mubr.bf16.mxu0 0
        %683 = vmatmul.mubr.bf16.gmra.mxu0 %v570
        %v684 = vpop.f32.mrf.mxu0
        %v685 = vadd.f32 0.0, %v684
        %v686 = vpop.f32.mrf.mxu0
        %v687 = vpop.f32.mrf.mxu0
        %v688 = vadd.f32 0.0, %v687
        %v689 = vpop.f32.mrf.mxu0
        %690 = vmatprep.mubr.bf16.mxu0 0
        %691 = vmatmul.mubr.bf16.gmra.mxu0 %v571
        %v692 = vpop.f32.mrf.mxu0
        %v693 = vadd.f32 0.0, %v692
        %v694 = vpop.f32.mrf.mxu0
        %v695 = vpop.f32.mrf.mxu0
        %v696 = vadd.f32 0.0, %v695
        %v697 = vpop.f32.mrf.mxu0
        %698 = vmatprep.mubr.bf16.mxu0 0
        %699 = vmatmul.mubr.bf16.gmra.mxu0 %v572
        %v700 = vpop.f32.mrf.mxu0
        %v701 = vadd.f32 0.0, %v700
        %v702 = vpop.f32.mrf.mxu0
        %v703 = vpop.f32.mrf.mxu0
        %v704 = vadd.f32 0.0, %v703
        %v705 = vpop.f32.mrf.mxu0
        %706 = vmatprep.mubr.bf16.mxu0 0
        %707 = vmatmul.mubr.bf16.gmra.mxu0 %v573
        %v708 = vpop.f32.mrf.mxu0
        %v709 = vadd.f32 0.0, %v708
        %v710 = vpop.f32.mrf.mxu0
        %v711 = vpop.f32.mrf.mxu0
        %v712 = vadd.f32 0.0, %v711
        %v713 = vpop.f32.mrf.mxu0
        %714 = vmatprep.mubr.bf16.mxu0 0
        %715 = vmatmul.mubr.bf16.gmra.mxu0 %v574
        %v716 = vpop.f32.mrf.mxu0
        %v717 = vadd.f32 0.0, %v716
        %v718 = vpop.f32.mrf.mxu0
        %v719 = vpop.f32.mrf.mxu0
        %v720 = vadd.f32 0.0, %v719
        %v721 = vpop.f32.mrf.mxu0
        %722 = vmatprep.mubr.bf16.mxu0 0
        %723 = vmatmul.mubr.bf16.gmra.mxu0 %v575
        %v724 = vpop.f32.mrf.mxu0
        %v725 = vadd.f32 0.0, %v724
        %v726 = vpop.f32.mrf.mxu0
        %v727 = vpop.f32.mrf.mxu0
        %v728 = vadd.f32 0.0, %v727
        %v729 = vpop.f32.mrf.mxu0
        %730 = vmatprep.mubr.bf16.mxu0 0
        %731 = vmatmul.mubr.bf16.gmra.mxu0 %v576
        %v732 = vpop.f32.mrf.mxu0
        %v733 = vadd.f32 0.0, %v732
        %v734 = vpop.f32.mrf.mxu0
        %v735 = vpop.f32.mrf.mxu0
        %v736 = vadd.f32 0.0, %v735
        %v737 = vpop.f32.mrf.mxu0
        %738 = vmatprep.mubr.bf16.mxu0 0
        %739 = vmatmul.mubr.bf16.gmra.mxu0 %v577
        %v740 = vpop.f32.mrf.mxu0
        %v741 = vadd.f32 0.0, %v740
        %v742 = vpop.f32.mrf.mxu0
        %v743 = vpop.f32.mrf.mxu0
        %v744 = vadd.f32 0.0, %v743
        %v745 = vpop.f32.mrf.mxu0
        %746 = vmatprep.mubr.bf16.mxu0 0
        %747 = vmatmul.mubr.bf16.gmra.mxu0 %v578
        %v748 = vpop.f32.mrf.mxu0
        %v749 = vadd.f32 0.0, %v748
        %v750 = vpop.f32.mrf.mxu0
        %v751 = vpop.f32.mrf.mxu0
        %v752 = vadd.f32 0.0, %v751
        %v753 = vpop.f32.mrf.mxu0
        %754 = vmatprep.mubr.bf16.mxu0 0
        %755 = vmatmul.mubr.bf16.gmra.mxu0 %v579
        %v756 = vpop.f32.mrf.mxu0
        %v757 = vadd.f32 0.0, %v756
        %v758 = vpop.f32.mrf.mxu0
        %v759 = vpop.f32.mrf.mxu0
        %v760 = vadd.f32 0.0, %v759
        %v761 = vpop.f32.mrf.mxu0
        %762 = vmatprep.mubr.bf16.mxu0 0
        %763 = vmatmul.mubr.bf16.gmra.mxu0 %v580
        %v764 = vpop.f32.mrf.mxu0
        %v765 = vadd.f32 0.0, %v764
        %v766 = vpop.f32.mrf.mxu0
        %v767 = vpop.f32.mrf.mxu0
        %v768 = vadd.f32 0.0, %v767
        %v769 = vpop.f32.mrf.mxu0
        %770 = vmatprep.mubr.bf16.mxu0 0
        %771 = vmatmul.mubr.bf16.gmra.mxu0 %v581
        %v772 = vpop.f32.mrf.mxu0
        %v773 = vadd.f32 0.0, %v772
        %v774 = vpop.f32.mrf.mxu0
        %v775 = vpop.f32.mrf.mxu0
        %v776 = vadd.f32 0.0, %v775
        %v777 = vpop.f32.mrf.mxu0
        %778 = vmatprep.mubr.bf16.mxu0 0
        %779 = vmatmul.mubr.bf16.gmra.mxu0 %v582
        %v780 = vpop.f32.mrf.mxu0
        %v781 = vadd.f32 0.0, %v780
        %v782 = vpop.f32.mrf.mxu0
        %v783 = vpop.f32.mrf.mxu0
        %v784 = vadd.f32 0.0, %v783
        %v785 = vpop.f32.mrf.mxu0
        %786 = vmatprep.mubr.bf16.mxu0 0
        %787 = vmatmul.mubr.bf16.gmra.mxu0 %v583
        %v788 = vpop.f32.mrf.mxu0
        %v789 = vadd.f32 0.0, %v788
        %v790 = vpop.f32.mrf.mxu0
        %v791 = vpop.f32.mrf.mxu0
        %v792 = vadd.f32 0.0, %v791
        %v793 = vpop.f32.mrf.mxu0
        %794 = vmatprep.mubr.bf16.mxu0 0
        %795 = vmatmul.mubr.bf16.gmra.mxu0 %v584
        %v796 = vpop.f32.mrf.mxu0
        %v797 = vadd.f32 0.0, %v796
        %v798 = vpop.f32.mrf.mxu0
        %v799 = vpop.f32.mrf.mxu0
        %v800 = vadd.f32 0.0, %v799
        %v801 = vpop.f32.mrf.mxu0
        %802 = vmatprep.mubr.bf16.mxu0 0
        %803 = vmatmul.mubr.bf16.gmra.mxu0 %v585
        %v804 = vpop.f32.mrf.mxu0
        %v805 = vadd.f32 0.0, %v804
        %v806 = vpop.f32.mrf.mxu0
        %v807 = vpop.f32.mrf.mxu0
        %v808 = vadd.f32 0.0, %v807
        %v809 = vpop.f32.mrf.mxu0
        %810 = vdwg.mxu0
        %v811 = vmax.f32 %v685, 0.0
        %v812 = vmax.f32 %v688, 0.0
        %v813 = vmax.f32 %v693, 0.0
        %v814 = vmax.f32 %v696, 0.0
        %v815 = vmax.f32 %v701, 0.0
        %v816 = vmax.f32 %v704, 0.0
        %v817 = vmax.f32 %v709, 0.0
        %v818 = vmax.f32 %v712, 0.0
        %v819 = vmax.f32 %v717, 0.0
        %v820 = vmax.f32 %v720, 0.0
        %v821 = vmax.f32 %v725, 0.0
        %v822 = vmax.f32 %v728, 0.0
        %v823 = vmax.f32 %v733, 0.0
        %v824 = vmax.f32 %v736, 0.0
        %v825 = vmax.f32 %v741, 0.0
        %v826 = vmax.f32 %v744, 0.0
        %v827 = vmax.f32 %v749, 0.0
        %v828 = vmax.f32 %v752, 0.0
        %v829 = vmax.f32 %v757, 0.0
        %v830 = vmax.f32 %v760, 0.0
        %v831 = vmax.f32 %v765, 0.0
        %v832 = vmax.f32 %v768, 0.0
        %v833 = vmax.f32 %v773, 0.0
        %v834 = vmax.f32 %v776, 0.0
        %v835 = vmax.f32 %v781, 0.0
        %v836 = vmax.f32 %v784, 0.0
        %v837 = vmax.f32 %v789, 0.0
        %v838 = vmax.f32 %v792, 0.0
        %v839 = vmax.f32 %v797, 0.0
        %v840 = vmax.f32 %v800, 0.0
        %v841 = vmax.f32 %v805, 0.0
        %v842 = vmax.f32 %v808, 0.0
        %v843 = vpack.c.bf16 %v812, %v811
        %v844 = vpack.c.bf16 %v814, %v813
        %v845 = vpack.c.bf16 %v816, %v815
        %v846 = vpack.c.bf16 %v818, %v817
        %v847 = vpack.c.bf16 %v820, %v819
        %v848 = vpack.c.bf16 %v822, %v821
        %v849 = vpack.c.bf16 %v824, %v823
        %v850 = vpack.c.bf16 %v826, %v825
        %v851 = vpack.c.bf16 %v828, %v827
        %v852 = vpack.c.bf16 %v830, %v829
        %v853 = vpack.c.bf16 %v832, %v831
        %v854 = vpack.c.bf16 %v834, %v833
        %v855 = vpack.c.bf16 %v836, %v835
        %v856 = vpack.c.bf16 %v838, %v837
        %v857 = vpack.c.bf16 %v840, %v839
        %v858 = vpack.c.bf16 %v842, %v841
        %v859 = vld [vmem:[%s3] sm:$0xf]
        %v860 = vld [vmem:[%s3 + $0x4] sm:$0xf]
        %v861 = vld [vmem:[%s3 + $0x8] sm:$0xf]
        %v862 = vld [vmem:[%s3 + $0xc] sm:$0xf]
        %v863 = vld [vmem:[%s3 + $0x10] sm:$0xf]
        %v864 = vld [vmem:[%s3 + $0x14] sm:$0xf]
        %v865 = vld [vmem:[%s3 + $0x18] sm:$0xf]
        %v866 = vld [vmem:[%s3 + $0x1c] sm:$0xf]
        %v867 = vld [vmem:[%s3 + $0x20] sm:$0xf]
        %v868 = vld [vmem:[%s3 + $0x24] sm:$0xf]
        %v869 = vld [vmem:[%s3 + $0x28] sm:$0xf]
        %v870 = vld [vmem:[%s3 + $0x2c] sm:$0xf]
        %v871 = vld [vmem:[%s3 + $0x30] sm:$0xf]
        %v872 = vld [vmem:[%s3 + $0x34] sm:$0xf]
        %v873 = vld [vmem:[%s3 + $0x38] sm:$0xf]
        %v874 = vld [vmem:[%s3 + $0x3c] sm:$0xf]
        %v891 = vunpack.c.l.b16 %v859
        %v892 = vunpack.c.l.b16 %v860
        %v893 = vunpack.c.l.b16 %v861
        %v894 = vunpack.c.l.b16 %v862
        %v895 = vunpack.c.l.b16 %v863
        %v896 = vunpack.c.l.b16 %v864
        %v897 = vunpack.c.l.b16 %v865
        %v898 = vunpack.c.l.b16 %v866
        %v899 = vunpack.c.l.b16 %v867
        %v900 = vunpack.c.l.b16 %v868
        %v901 = vunpack.c.l.b16 %v869
        %v902 = vunpack.c.l.b16 %v870
        %v903 = vunpack.c.l.b16 %v871
        %v904 = vunpack.c.l.b16 %v872
        %v905 = vunpack.c.l.b16 %v873
        %v906 = vunpack.c.l.b16 %v874
        %v907 = vpack.c.b16 %v892, %v891
        %v908 = vpack.c.b16 %v894, %v893
        %v909 = vpack.c.b16 %v896, %v895
        %v910 = vpack.c.b16 %v898, %v897
        %v911 = vpack.c.b16 %v900, %v899
        %v912 = vpack.c.b16 %v902, %v901
        %v913 = vpack.c.b16 %v904, %v903
        %v914 = vpack.c.b16 %v906, %v905
        %923 = vmatprep.subr.bf16.mxu0 0
        %924 = vmatpush1.bf16.msra.mxu0 %v914
        %925 = vmatprep.subr.bf16.mxu0 0
        %926 = vmatpush1.bf16.msra.mxu0 %v913
        %927 = vmatprep.subr.bf16.mxu0 0
        %928 = vmatpush1.bf16.msra.mxu0 %v912
        %929 = vmatprep.subr.bf16.mxu0 0
        %930 = vmatpush1.bf16.msra.mxu0 %v911
        %931 = vmatprep.subr.bf16.mxu0 0
        %932 = vmatpush1.bf16.msra.mxu0 %v910
        %933 = vmatprep.subr.bf16.mxu0 0
        %934 = vmatpush1.bf16.msra.mxu0 %v909
        %935 = vmatprep.subr.bf16.mxu0 0
        %936 = vmatpush1.bf16.msra.mxu0 %v908
        %937 = vmatprep.subr.bf16.mxu0 0
        %938 = vmatpush1.bf16.msra.mxu0 %v907
        %939 = vmatprep.subr.bf16.mxu0 0
        %940 = vmatpush2.bf16.msra.mxu0 0
        %941 = vmatprep.subr.bf16.mxu0 0
        %942 = vmatpush2.bf16.msra.mxu0 0
        %943 = vmatprep.subr.bf16.mxu0 0
        %944 = vmatpush2.bf16.msra.mxu0 0
        %945 = vmatprep.subr.bf16.mxu0 0
        %946 = vmatpush2.bf16.msra.mxu0 0
        %947 = vmatprep.subr.bf16.mxu0 0
        %948 = vmatpush2.bf16.msra.mxu0 0
        %949 = vmatprep.subr.bf16.mxu0 0
        %950 = vmatpush2.bf16.msra.mxu0 0
        %951 = vmatprep.subr.bf16.mxu0 0
        %952 = vmatpush2.bf16.msra.mxu0 0
        %953 = vmatprep.subr.bf16.mxu0 0
        %954 = vmatpush2.bf16.msra.mxu0 0
        %955 = vmatprep.mubr.bf16.mxu0 0
        %956 = vmatmul.mubr.bf16.gmra.mxu0 %v843
        %v957 = vpop.f32.mrf.mxu0
        %v958 = vadd.f32 0.0, %v957
        %v959 = vpop.f32.mrf.mxu0
        %v960 = vpop.f32.mrf.mxu0
        %v961 = vadd.f32 0.0, %v960
        %v962 = vpop.f32.mrf.mxu0
        %963 = vmatprep.mubr.bf16.mxu0 0
        %964 = vmatmul.mubr.bf16.gmra.mxu0 %v844
        %v965 = vpop.f32.mrf.mxu0
        %v966 = vadd.f32 0.0, %v965
        %v967 = vpop.f32.mrf.mxu0
        %v968 = vpop.f32.mrf.mxu0
        %v969 = vadd.f32 0.0, %v968
        %v970 = vpop.f32.mrf.mxu0
        %971 = vmatprep.mubr.bf16.mxu0 0
        %972 = vmatmul.mubr.bf16.gmra.mxu0 %v845
        %v973 = vpop.f32.mrf.mxu0
        %v974 = vadd.f32 0.0, %v973
        %v975 = vpop.f32.mrf.mxu0
        %v976 = vpop.f32.mrf.mxu0
        %v977 = vadd.f32 0.0, %v976
        %v978 = vpop.f32.mrf.mxu0
        %979 = vmatprep.mubr.bf16.mxu0 0
        %980 = vmatmul.mubr.bf16.gmra.mxu0 %v846
        %v981 = vpop.f32.mrf.mxu0
        %v982 = vadd.f32 0.0, %v981
        %v983 = vpop.f32.mrf.mxu0
        %v984 = vpop.f32.mrf.mxu0
        %v985 = vadd.f32 0.0, %v984
        %v986 = vpop.f32.mrf.mxu0
        %987 = vmatprep.mubr.bf16.mxu0 0
        %988 = vmatmul.mubr.bf16.gmra.mxu0 %v847
        %v989 = vpop.f32.mrf.mxu0
        %v990 = vadd.f32 0.0, %v989
        %v991 = vpop.f32.mrf.mxu0
        %v992 = vpop.f32.mrf.mxu0
        %v993 = vadd.f32 0.0, %v992
        %v994 = vpop.f32.mrf.mxu0
        %995 = vmatprep.mubr.bf16.mxu0 0
        %996 = vmatmul.mubr.bf16.gmra.mxu0 %v848
        %v997 = vpop.f32.mrf.mxu0
        %v998 = vadd.f32 0.0, %v997
        %v999 = vpop.f32.mrf.mxu0
        %v1000 = vpop.f32.mrf.mxu0
        %v1001 = vadd.f32 0.0, %v1000
        %v1002 = vpop.f32.mrf.mxu0
        %1003 = vmatprep.mubr.bf16.mxu0 0
        %1004 = vmatmul.mubr.bf16.gmra.mxu0 %v849
        %v1005 = vpop.f32.mrf.mxu0
        %v1006 = vadd.f32 0.0, %v1005
        %v1007 = vpop.f32.mrf.mxu0
        %v1008 = vpop.f32.mrf.mxu0
        %v1009 = vadd.f32 0.0, %v1008
        %v1010 = vpop.f32.mrf.mxu0
        %1011 = vmatprep.mubr.bf16.mxu0 0
        %1012 = vmatmul.mubr.bf16.gmra.mxu0 %v850
        %v1013 = vpop.f32.mrf.mxu0
        %v1014 = vadd.f32 0.0, %v1013
        %v1015 = vpop.f32.mrf.mxu0
        %v1016 = vpop.f32.mrf.mxu0
        %v1017 = vadd.f32 0.0, %v1016
        %v1018 = vpop.f32.mrf.mxu0
        %1019 = vmatprep.mubr.bf16.mxu0 0
        %1020 = vmatmul.mubr.bf16.gmra.mxu0 %v851
        %v1021 = vpop.f32.mrf.mxu0
        %v1022 = vadd.f32 0.0, %v1021
        %v1023 = vpop.f32.mrf.mxu0
        %v1024 = vpop.f32.mrf.mxu0
        %v1025 = vadd.f32 0.0, %v1024
        %v1026 = vpop.f32.mrf.mxu0
        %1027 = vmatprep.mubr.bf16.mxu0 0
        %1028 = vmatmul.mubr.bf16.gmra.mxu0 %v852
        %v1029 = vpop.f32.mrf.mxu0
        %v1030 = vadd.f32 0.0, %v1029
        %v1031 = vpop.f32.mrf.mxu0
        %v1032 = vpop.f32.mrf.mxu0
        %v1033 = vadd.f32 0.0, %v1032
        %v1034 = vpop.f32.mrf.mxu0
        %1035 = vmatprep.mubr.bf16.mxu0 0
        %1036 = vmatmul.mubr.bf16.gmra.mxu0 %v853
        %v1037 = vpop.f32.mrf.mxu0
        %v1038 = vadd.f32 0.0, %v1037
        %v1039 = vpop.f32.mrf.mxu0
        %v1040 = vpop.f32.mrf.mxu0
        %v1041 = vadd.f32 0.0, %v1040
        %v1042 = vpop.f32.mrf.mxu0
        %1043 = vmatprep.mubr.bf16.mxu0 0
        %1044 = vmatmul.mubr.bf16.gmra.mxu0 %v854
        %v1045 = vpop.f32.mrf.mxu0
        %v1046 = vadd.f32 0.0, %v1045
        %v1047 = vpop.f32.mrf.mxu0
        %v1048 = vpop.f32.mrf.mxu0
        %v1049 = vadd.f32 0.0, %v1048
        %v1050 = vpop.f32.mrf.mxu0
        %1051 = vmatprep.mubr.bf16.mxu0 0
        %1052 = vmatmul.mubr.bf16.gmra.mxu0 %v855
        %v1053 = vpop.f32.mrf.mxu0
        %v1054 = vadd.f32 0.0, %v1053
        %v1055 = vpop.f32.mrf.mxu0
        %v1056 = vpop.f32.mrf.mxu0
        %v1057 = vadd.f32 0.0, %v1056
        %v1058 = vpop.f32.mrf.mxu0
        %1059 = vmatprep.mubr.bf16.mxu0 0
        %1060 = vmatmul.mubr.bf16.gmra.mxu0 %v856
        %v1061 = vpop.f32.mrf.mxu0
        %v1062 = vadd.f32 0.0, %v1061
        %v1063 = vpop.f32.mrf.mxu0
        %v1064 = vpop.f32.mrf.mxu0
        %v1065 = vadd.f32 0.0, %v1064
        %v1066 = vpop.f32.mrf.mxu0
        %1067 = vmatprep.mubr.bf16.mxu0 0
        %1068 = vmatmul.mubr.bf16.gmra.mxu0 %v857
        %v1069 = vpop.f32.mrf.mxu0
        %v1070 = vadd.f32 0.0, %v1069
        %v1071 = vpop.f32.mrf.mxu0
        %v1072 = vpop.f32.mrf.mxu0
        %v1073 = vadd.f32 0.0, %v1072
        %v1074 = vpop.f32.mrf.mxu0
        %1075 = vmatprep.mubr.bf16.mxu0 0
        %1076 = vmatmul.mubr.bf16.gmra.mxu0 %v858
        %v1077 = vpop.f32.mrf.mxu0
        %v1078 = vadd.f32 0.0, %v1077
        %v1079 = vpop.f32.mrf.mxu0
        %v1080 = vpop.f32.mrf.mxu0
        %v1081 = vadd.f32 0.0, %v1080
        %v1082 = vpop.f32.mrf.mxu0
        %1083 = vdwg.mxu0
        %1084 = vst [vmem:[%s191] sm:$0xff] %v958
        %1085 = vst [vmem:[%s191 + $0x8] sm:$0xff] %v961
        %1086 = vst [vmem:[%s191 + $0x10] sm:$0xff] %v966
        %1087 = vst [vmem:[%s191 + $0x18] sm:$0xff] %v969
        %1088 = vst [vmem:[%s191 + $0x20] sm:$0xff] %v974
        %1089 = vst [vmem:[%s191 + $0x28] sm:$0xff] %v977
        %1090 = vst [vmem:[%s191 + $0x30] sm:$0xff] %v982
        %1091 = vst [vmem:[%s191 + $0x38] sm:$0xff] %v985
        %1092 = vst [vmem:[%s191 + $0x40] sm:$0xff] %v990
        %1093 = vst [vmem:[%s191 + $0x48] sm:$0xff] %v993
        %1094 = vst [vmem:[%s191 + $0x50] sm:$0xff] %v998
        %1095 = vst [vmem:[%s191 + $0x58] sm:$0xff] %v1001
        %1096 = vst [vmem:[%s191 + $0x60] sm:$0xff] %v1006
        %1097 = vst [vmem:[%s191 + $0x68] sm:$0xff] %v1009
        %1098 = vst [vmem:[%s191 + $0x70] sm:$0xff] %v1014
        %1099 = vst [vmem:[%s191 + $0x78] sm:$0xff] %v1017
        %1100 = vst [vmem:[%s191 + $0x80] sm:$0xff] %v1022
        %1101 = vst [vmem:[%s191 + $0x88] sm:$0xff] %v1025
        %1102 = vst [vmem:[%s191 + $0x90] sm:$0xff] %v1030
        %1103 = vst [vmem:[%s191 + $0x98] sm:$0xff] %v1033
        %1104 = vst [vmem:[%s191 + $0xa0] sm:$0xff] %v1038
        %1105 = vst [vmem:[%s191 + $0xa8] sm:$0xff] %v1041
        %1106 = vst [vmem:[%s191 + $0xb0] sm:$0xff] %v1046
        %1107 = vst [vmem:[%s191 + $0xb8] sm:$0xff] %v1049
        %1108 = vst [vmem:[%s191 + $0xc0] sm:$0xff] %v1054
        %1109 = vst [vmem:[%s191 + $0xc8] sm:$0xff] %v1057
        %1110 = vst [vmem:[%s191 + $0xd0] sm:$0xff] %v1062
        %1111 = vst [vmem:[%s191 + $0xd8] sm:$0xff] %v1065
        %1112 = vst [vmem:[%s191 + $0xe0] sm:$0xff] %v1070
        %1113 = vst [vmem:[%s191 + $0xe8] sm:$0xff] %v1073
        %1114 = vst [vmem:[%s191 + $0xf0] sm:$0xff] %v1078
        %1115 = vst [vmem:[%s191 + $0xf8] sm:$0xff] %v1081
        %s1116 = sand.u32 %s115, 1
        %s1117 = scalar_lea.sflag [#allocation3], %s1116
        %s1118 = sand.u32 %s115, 1
        %s1119 = smul.addr %s1118, 256
        %s1120 = scalar_lea.vmem [#allocation2], %s1119
        // Predicated region
        $region37: #{tpu_custom_call.1} parent=35 // pred_check
          %p1121 = pneg %p125
        $region38: #{tpu_custom_call.1} parent=35 // pred_check_branch
          %1123 = sbr.rel (%p1121) target = $region40
        $region39: #{tpu_custom_call.1} parent=35 // pred_region
          %s1124 = smul.u32 32, %s18
          %s1126 = ssub.s32 4096, 4096
          %1127 = vsyncadd %s1117, %s1126
          %s1128 = smul.addr %s1124, 128
          %s1129 = scalar_lea.hbm %s4, %s1128
          %s1130 = sshll.u32 %s1120, 4
          %s1131 = int_to_ptr.vmem [resolvable:$true] %s1130
          %1136 = dma.vmem_to_hbm [thread:$0]  %s1131, 4096, %s1129, %s1117, 128, 128, 8
        $region40: #{tpu_custom_call.1} parent=35 // pred_fallthru
          _
      $region36: #{tpu_custom_call.1} parent=5 // pred_fallthru
        _
      %p1137 = scmp.le.s32.totalorder 2, %s13
      // Predicated region
      $region41: #{tpu_custom_call.1} parent=5 // pred_check
        %p1138 = pneg %p1137
      $region42: #{tpu_custom_call.1} parent=5 // pred_check_branch
        %1140 = sbr.rel (%p1138) target = $region44
      $region43: #{tpu_custom_call.1} parent=5 // pred_region
        %s1141 = ssub.s32 %s13, 2
        // Predicated region
        $region45: #{tpu_custom_call.1} parent=43 // pred_check
          %p1142 = pneg %p131
        $region46: #{tpu_custom_call.1} parent=43 // pred_check_branch
          %1144 = sbr.rel (%p1142) target = $region48
        $region47: #{tpu_custom_call.1} parent=43 // pred_region
          %s1145 = sand.u32 %s116, 1
          %s1146 = scalar_lea.sflag [#allocation3], %s1145
          %s1147 = sand.u32 %s116, 1
          %s1148 = smul.addr %s1147, 256
          %s1149 = scalar_lea.vmem [#allocation2], %s1148
          %1150 = dma.done %s1146, 4096
        $region48: #{tpu_custom_call.1} parent=43 // pred_fallthru
          _
      $region44: #{tpu_custom_call.1} parent=5 // pred_fallthru
        _
    $region6: #{tpu_custom_call.1} parent=1 // loop_footer
      %s17 = sadd.s32 1, %s13
    $region7: #{tpu_custom_call.1} parent=1 // loop_footer_branch
      %12 = sbr.rel target = $region3
    $region8: #{tpu_custom_call.1} parent=1 // loop_exit
      _
    %1151 = vsyncpa [#allocation3], 1
    %s1152 = scalar_lea.sflag [#allocation3], 1
    %1153 = vsyncpa %s1152, 1

</llo_original>
